<compile_context>
chip_gen: v7x
topology: tpu7x:2x2x1
jax: 0.10.0
libtpu: 0.0.40
codegen_flags: <defaults>
</compile_context>

<pallas_src>
import functools

import jax
import jax.numpy as jnp
from jax.experimental import pallas as pl
from jax.experimental.pallas import tpu as pltpu


def _round_up(x, m):
    return (x + m - 1) // m * m


def _pick_seq_tile(n, max_tile=256):
    """Largest multiple-of-8 tile <= max_tile that divides n (else full n)."""
    if n <= max_tile:
        return n
    for t in range(max_tile, 7, -8):
        if n % t == 0:
            return t
    return n


# ---------------------------------------------------------------------------
# Linear (matmul + fused bias): one row-tile per grid step, weights resident.
# ---------------------------------------------------------------------------
def _linear_kernel(x_ref, w_ref, b_ref, o_ref):
    acc = jnp.dot(x_ref[...], w_ref[...], preferred_element_type=jnp.float32)
    o_ref[...] = (acc + b_ref[...].astype(jnp.float32)).astype(o_ref.dtype)


def linear_pallas(x2d, w, b, *, tm_max=256):
    """(M, K) @ (K, N) + b. Works in the input dtype with f32 MXU accumulation."""
    M, K = x2d.shape
    K2, N = w.shape
    assert K == K2
    tm = min(tm_max, _round_up(M, 8))
    Mp = _round_up(M, tm)
    xpad = x2d if Mp == M else jnp.pad(x2d, ((0, Mp - M), (0, 0)))
    out = pl.pallas_call(
        _linear_kernel,
        out_shape=jax.ShapeDtypeStruct((Mp, N), x2d.dtype),
        grid_spec=pltpu.PrefetchScalarGridSpec(
            num_scalar_prefetch=0,
            grid=(Mp // tm,),
            in_specs=[
                pl.BlockSpec((tm, K), lambda i: (i, 0)),
                pl.BlockSpec((K, N), lambda i: (0, 0)),
                pl.BlockSpec((1, N), lambda i: (0, 0)),
            ],
            out_specs=pl.BlockSpec((tm, N), lambda i: (i, 0)),
        ),
        compiler_params=pltpu.CompilerParams(dimension_semantics=("parallel",)),
    )(xpad, w, b.reshape(1, N))
    return out if Mp == M else out[:M]


# ---------------------------------------------------------------------------
# sr_ratio > 1: fused patch-merge matmul (== Conv2d k=s=sr) + LayerNorm + kv
# projection, all kept in VMEM.
# ---------------------------------------------------------------------------
def _sr_kv_kernel(xp_ref, w2_ref, bsr_ref, g_ref, beta_ref, wkv_ref, bkv_ref,
                  o_ref, *, eps):
    h = jnp.dot(xp_ref[...], w2_ref[...], preferred_element_type=jnp.float32)
    h = h + bsr_ref[...].astype(jnp.float32)                       # (tm, C)
    mu = jnp.mean(h, axis=-1, keepdims=True)
    var = jnp.mean(jnp.square(h - mu), axis=-1, keepdims=True)
    hn = (h - mu) * jax.lax.rsqrt(var + eps)
    hn = hn * g_ref[...].astype(jnp.float32) + beta_ref[...].astype(jnp.float32)
    kv = jnp.dot(hn.astype(wkv_ref.dtype), wkv_ref[...],
                 preferred_element_type=jnp.float32)
    o_ref[...] = (kv + bkv_ref[...].astype(jnp.float32)).astype(o_ref.dtype)


def sr_kv_pallas(xp2d, w2, b_sr, ln_g, ln_b, wkv, bkv, *, eps=1e-5, tm_max=256):
    M, K2 = xp2d.shape
    C = w2.shape[1]
    N2 = wkv.shape[1]
    tm = min(tm_max, _round_up(M, 8))
    Mp = _round_up(M, tm)
    xpad = xp2d if Mp == M else jnp.pad(xp2d, ((0, Mp - M), (0, 0)))
    kernel = functools.partial(_sr_kv_kernel, eps=eps)
    out = pl.pallas_call(
        kernel,
        out_shape=jax.ShapeDtypeStruct((Mp, N2), xp2d.dtype),
        grid_spec=pltpu.PrefetchScalarGridSpec(
            num_scalar_prefetch=0,
            grid=(Mp // tm,),
            in_specs=[
                pl.BlockSpec((tm, K2), lambda i: (i, 0)),
                pl.BlockSpec((K2, C), lambda i: (0, 0)),
                pl.BlockSpec((1, C), lambda i: (0, 0)),
                pl.BlockSpec((1, C), lambda i: (0, 0)),
                pl.BlockSpec((1, C), lambda i: (0, 0)),
                pl.BlockSpec((C, N2), lambda i: (0, 0)),
                pl.BlockSpec((1, N2), lambda i: (0, 0)),
            ],
            out_specs=pl.BlockSpec((tm, N2), lambda i: (i, 0)),
        ),
        compiler_params=pltpu.CompilerParams(dimension_semantics=("parallel",)),
    )(xpad, w2, b_sr.reshape(1, C), ln_g.reshape(1, C), ln_b.reshape(1, C),
      wkv, bkv.reshape(1, N2))
    return out if Mp == M else out[:M]


# ---------------------------------------------------------------------------
# Flash multi-head attention: grid = (B, q-tiles, kv-tiles).  One grid step
# handles ALL heads of a (batch, q-tile); q/k/v come straight out of the
# projection tensors via last-dim column-block indices; output is one
# lane-dense (tq, C) slab.
# ---------------------------------------------------------------------------
def _flash_mha_kernel(q_ref, k_ref, v_ref, o_ref, m_sc, l_sc, acc_sc,
                      *, num_heads):
    kv_idx = pl.program_id(2)

    @pl.when(kv_idx == 0)
    def _():
        m_sc[...] = jnp.full_like(m_sc, -jnp.inf)
        l_sc[...] = jnp.zeros_like(l_sc)
        acc_sc[...] = jnp.zeros_like(acc_sc)

    q = q_ref[0]            # (tq, C); softmax scale already folded into wq/bq
    k = k_ref[0]            # (tk, C); native dtype (bf16 stays bf16 on the MXU)
    v = v_ref[0]            # (tk, C)
    tq, C = q.shape
    d = C // num_heads

    for h in range(num_heads):          # static unroll over heads
        lo, hi = h * d, (h + 1) * d
        qh, kh, vh = q[:, lo:hi], k[:, lo:hi], v[:, lo:hi]
        s = jax.lax.dot_general(qh, kh, (((1,), (1,)), ((), ())),
                                preferred_element_type=jnp.float32)   # (tq, tk)
        m_prev = m_sc[h]                                              # (tq, 128)
        l_prev = l_sc[h]
        m_new = jnp.maximum(m_prev, jnp.max(s, axis=-1, keepdims=True))
        alpha = jnp.exp(m_prev - m_new)
        p = jnp.exp(s - m_new[:, 0:1])                                # (tq, tk)
        l_sc[h] = alpha * l_prev + jnp.sum(p, axis=-1, keepdims=True)
        m_sc[h] = m_new
        acc_sc[:, lo:hi] = acc_sc[:, lo:hi] * alpha[:, 0:1] + jnp.dot(
            p.astype(v.dtype), vh, preferred_element_type=jnp.float32)

    @pl.when(kv_idx == pl.num_programs(2) - 1)
    def _():
        inv = jnp.concatenate(
            [jnp.broadcast_to(pl.reciprocal(l_sc[h][:, 0:1], approx=True),
                              (tq, d))
             for h in range(num_heads)], axis=-1)                     # (tq, C)
        o_ref[0] = (acc_sc[...] * inv).astype(o_ref.dtype)


def flash_mha_pallas(q_src, k_src, v_src, *, num_heads, C, q_col, k_col, v_col):
    """q_src: (B, Nq, *), k_src/v_src: (B, Nkv, *).  q/k/v live at last-dim
    column block q_col/k_col/v_col (block width C) of their source tensors."""
    B, Nq, _ = q_src.shape
    _, Nkv, _ = k_src.shape
    tq = _pick_seq_tile(Nq)
    # Small kv sequences (the sr path) stay a single resident K/V block, so
    # K/V are DMA'd once per (batch, q-tile) and the kv grid axis is 1.
    tk = Nkv if Nkv <= 512 else _pick_seq_tile(Nkv)
    kernel = functools.partial(_flash_mha_kernel, num_heads=num_heads)
    return pl.pallas_call(
        kernel,
        out_shape=jax.ShapeDtypeStruct((B, Nq, C), q_src.dtype),
        grid_spec=pltpu.PrefetchScalarGridSpec(
            num_scalar_prefetch=0,
            grid=(B, Nq // tq, Nkv // tk),
            in_specs=[
                pl.BlockSpec((1, tq, C), lambda b, i, j, c=q_col: (b, i, c)),
                pl.BlockSpec((1, tk, C), lambda b, i, j, c=k_col: (b, j, c)),
                pl.BlockSpec((1, tk, C), lambda b, i, j, c=v_col: (b, j, c)),
            ],
            out_specs=pl.BlockSpec((1, tq, C), lambda b, i, j: (b, i, 0)),
            scratch_shapes=[
                pltpu.VMEM((num_heads, tq, 128), jnp.float32),   # running max
                pltpu.VMEM((num_heads, tq, 128), jnp.float32),   # running sum
                pltpu.VMEM((tq, C), jnp.float32),                # output acc
            ],
        ),
        compiler_params=pltpu.CompilerParams(
            dimension_semantics=("parallel", "parallel", "arbitrary")),
    )(q_src, k_src, v_src)


# ---------------------------------------------------------------------------
# Host-side one-time weight repack (PyTorch layout -> kernel-friendly layout).
# ---------------------------------------------------------------------------
def prepare_params(params, *, num_heads, sr_ratio, dtype=None):
    """Folds the softmax scale into the q projection, fuses q|kv weights when
    sr_ratio == 1 (lane-contiguous column blocks), and rewrites the sr conv
    (kernel == stride == sr) as a patch-merge matmul weight.  Pass
    dtype=jnp.bfloat16 to run the MXU in bf16 with f32 accumulation."""
    cast = (lambda a: a.astype(dtype)) if dtype is not None else (lambda a: a)
    C = params["wq"].shape[0]
    scale = (C // num_heads) ** (-0.5)
    wq = params["wq"] * scale
    bq = params["bq"] * scale
    out = {"w_proj": cast(params["w_proj"]), "b_proj": cast(params["b_proj"])}
    if sr_ratio == 1:
        out["wqkv"] = cast(jnp.concatenate([wq, params["wkv"]], axis=1))
        out["bqkv"] = cast(jnp.concatenate([bq, params["bkv"]], axis=0))
    else:
        sr = sr_ratio
        out["wq"], out["bq"] = cast(wq), cast(bq)
        out["wkv"], out["bkv"] = cast(params["wkv"]), cast(params["bkv"])
        # conv weight (C_out, C_in, sr, sr) -> patch-merge matmul (sr*sr*C, C)
        out["w_sr2"] = cast(jnp.transpose(params["w_sr"], (2, 3, 1, 0))
                            .reshape(sr * sr * C, C))
        out["b_sr"] = cast(params["b_sr"])
        out["ln_g"], out["ln_b"] = cast(params["ln_g"]), cast(params["ln_b"])
    return out


# ---------------------------------------------------------------------------
# Full module forward (matches pcpvt.Attention.forward at inference).
# ---------------------------------------------------------------------------
def pcpvt_attention_forward(x, H, W, kp, *, num_heads, sr_ratio=1):
    B, N, C = x.shape
    assert N == H * W and C % num_heads == 0

    if sr_ratio == 1:
        # Fused q|k|v projection: one pass over x, lane-contiguous column blocks.
        qkv = linear_pallas(x.reshape(B * N, C), kp["wqkv"], kp["bqkv"])
        q_src = k_src = v_src = qkv.reshape(B, N, 3 * C)
        q_col, k_col, v_col = 0, 1, 2
    else:
        sr = sr_ratio
        q_src = linear_pallas(x.reshape(B * N, C), kp["wq"],
                              kp["bq"]).reshape(B, N, C)
        Hs, Ws = H // sr, W // sr
        Nkv = Hs * Ws
        # Patch-merge view of the sr conv (kernel == stride == sr).
        # TODO(synk): fold this patch gather into the sr-kv kernel's index_map.
        xp = (x.reshape(B, Hs, sr, Ws, sr, C)
               .transpose(0, 1, 3, 2, 4, 5)
               .reshape(B * Nkv, sr * sr * C))
        kv = sr_kv_pallas(xp, kp["w_sr2"], kp["b_sr"], kp["ln_g"], kp["ln_b"],
                          kp["wkv"], kp["bkv"]).reshape(B, Nkv, 2 * C)
        k_src = v_src = kv
        q_col, k_col, v_col = 0, 0, 1

    if C % 128 == 0:
        o = flash_mha_pallas(q_src, k_src, v_src, num_heads=num_heads, C=C,
                             q_col=q_col, k_col=k_col, v_col=v_col)
    else:
        # Column blocking needs C to be a lane multiple; fall back to explicit
        # slices (full-extent last-dim blocks) for odd channel counts.
        o = flash_mha_pallas(
            q_src[..., q_col * C:(q_col + 1) * C],
            k_src[..., k_col * C:(k_col + 1) * C],
            v_src[..., v_col * C:(v_col + 1) * C],
            num_heads=num_heads, C=C, q_col=0, k_col=0, v_col=0)

    # Output projection; attn_drop / proj_drop are identity at inference.
    out = linear_pallas(o.reshape(B * N, C), kp["w_proj"], kp["b_proj"])
    return out.reshape(B, N, C)


# ---------------------------------------------------------------------------
# Plain-JAX reference mirroring the PyTorch module (PyTorch weight layout).
# ---------------------------------------------------------------------------
def _spatial_reduce_reference(x, H, W, params, sr_ratio):
    B, N, C = x.shape
    x_img = jnp.transpose(x, (0, 2, 1)).reshape(B, C, H, W)
    x_red = jax.lax.conv_general_dilated(
        x_img, params["w_sr"], window_strides=(sr_ratio, sr_ratio),
        padding="VALID", dimension_numbers=("NCHW", "OIHW", "NCHW"))
    x_red = x_red + params["b_sr"][None, :, None, None]
    x_kv = jnp.transpose(x_red.reshape(B, C, -1), (0, 2, 1))
    mu = jnp.mean(x_kv, axis=-1, keepdims=True)
    var = jnp.mean(jnp.square(x_kv - mu), axis=-1, keepdims=True)
    x_kv = (x_kv - mu) * jax.lax.rsqrt(var + 1e-5)
    return x_kv * params["ln_g"] + params["ln_b"]


def attention_reference(x, H, W, params, *, num_heads, sr_ratio=1):
    B, N, C = x.shape
    d = C // num_heads
    scale = d ** (-0.5)
    q = (x @ params["wq"] + params["bq"]).reshape(B, N, num_heads, d)
    q = q.transpose(0, 2, 1, 3)
    x_kv = (_spatial_reduce_reference(x, H, W, params, sr_ratio)
            if sr_ratio > 1 else x)
    Nkv = x_kv.shape[1]
    kv = (x_kv @ params["wkv"] + params["bkv"]).reshape(B, Nkv, 2, num_heads, d)
    kv = kv.transpose(2, 0, 3, 1, 4)
    k, v = kv[0], kv[1]
    attn = jnp.einsum("bhqd,bhkd->bhqk", q, k) * scale
    attn = jax.nn.softmax(attn, axis=-1)
    o = jnp.einsum("bhqk,bhkd->bhqd", attn, v)
    o = o.transpose(0, 2, 1, 3).reshape(B, N, C)
    return o @ params["w_proj"] + params["b_proj"]


if __name__ == "__main__":
    B, H, W = 2, 8, 8
    C, num_heads = 128, 4          # lane-dense channels (multiple of 128)
    N = H * W

    key = jax.random.PRNGKey(0)
    keys = jax.random.split(key, 10)

    def mk(k, shape, s=0.05):
        return jax.random.normal(k, shape, dtype=jnp.float32) * s

    x = jax.random.normal(keys[0], (B, N, C), dtype=jnp.float32)

    params = dict(
        wq=mk(keys[1], (C, C)), bq=jnp.zeros((C,), jnp.float32),    # qkv_bias=False
        wkv=mk(keys[2], (C, 2 * C)), bkv=jnp.zeros((2 * C,), jnp.float32),
        w_proj=mk(keys[3], (C, C)), b_proj=mk(keys[4], (C,)),
    )

    # --- sr_ratio = 1 path (fused q|k|v projection) ---
    kp1 = prepare_params(params, num_heads=num_heads, sr_ratio=1)
    out1 = jax.block_until_ready(
        pcpvt_attention_forward(x, H, W, kp1, num_heads=num_heads, sr_ratio=1))
    ref1 = attention_reference(x, H, W, params, num_heads=num_heads, sr_ratio=1)
    assert out1.shape == (B, N, C)
    assert jnp.allclose(out1, ref1, atol=2e-3, rtol=2e-3), \
        float(jnp.max(jnp.abs(out1 - ref1)))

    # --- sr_ratio = 2 path (fused patch-merge + LN + kv projection) ---
    sr = 2
    params_sr = dict(params)
    params_sr.update(
        w_sr=mk(keys[5], (C, C, sr, sr)),
        b_sr=mk(keys[6], (C,)),
        ln_g=jnp.ones((C,), jnp.float32) + mk(keys[7], (C,)),
        ln_b=mk(keys[8], (C,)),
    )
    kp2 = prepare_params(params_sr, num_heads=num_heads, sr_ratio=sr)
    out2 = jax.block_until_ready(
        pcpvt_attention_forward(x, H, W, kp2, num_heads=num_heads, sr_ratio=sr))
    ref2 = attention_reference(x, H, W, params_sr, num_heads=num_heads, sr_ratio=sr)
    assert out2.shape == (B, N, C)
    assert jnp.allclose(out2, ref2, atol=2e-3, rtol=2e-3), \
        float(jnp.max(jnp.abs(out2 - ref2)))

    print("KERNEL_OK")
</pallas_src>

<mosaic_0001>
module attributes {stable_mosaic.version = 11 : i64} {
  func.func @_linear_kernel(%arg0: i32, %arg1: memref<128x128xf32, #tpu.memory_space<vmem>>, %arg2: memref<128x384xf32, #tpu.memory_space<vmem>>, %arg3: memref<1x384xf32, #tpu.memory_space<vmem>>, %arg4: memref<128x384xf32, #tpu.memory_space<vmem>>) attributes {dimension_semantics = [#tpu.dimension_semantics<parallel>], iteration_bounds = array<i64: 1>, scalar_prefetch = 0 : i64, scratch_operands = 0 : i64, tpu.core_type = #tpu.core_type<tc>, window_params = [{transform_indices = @transform_0, window_bounds = array<i64: 128, 128>}, {pipeline_mode = #tpu.pipeline_mode<synchronous>, transform_indices = @transform_1, window_bounds = array<i64: 128, 384>}, {pipeline_mode = #tpu.pipeline_mode<synchronous>, transform_indices = @transform_2, window_bounds = array<i64: 1, 384>}, {transform_indices = @transform_3, window_bounds = array<i64: 128, 384>}]} {
    %c0 = arith.constant 0 : index
    %c0_0 = arith.constant 0 : index
    %0 = vector.load %arg1[%c0, %c0_0] : memref<128x128xf32, #tpu.memory_space<vmem>>, vector<128x128xf32>
    %c0_1 = arith.constant 0 : index
    %c0_2 = arith.constant 0 : index
    %1 = vector.load %arg2[%c0_1, %c0_2] : memref<128x384xf32, #tpu.memory_space<vmem>>, vector<128x384xf32>
    %cst = arith.constant dense<0.000000e+00> : vector<128x384xf32>
    %2 = tpu.matmul %0, %1, %cst {dimension_numbers = #tpu.dot_dimension_numbers<[1], [0], [0], [1], [0, 0, 1, 1], [], []>} : vector<128x128xf32>, vector<128x384xf32>, vector<128x384xf32> -> vector<128x384xf32>
    %c0_3 = arith.constant 0 : index
    %c0_4 = arith.constant 0 : index
    %3 = vector.load %arg3[%c0_3, %c0_4] : memref<1x384xf32, #tpu.memory_space<vmem>>, vector<1x384xf32>
    %4 = vector.broadcast %3 : vector<1x384xf32> to vector<128x384xf32>
    %5 = arith.addf %2, %4 : vector<128x384xf32>
    %c0_5 = arith.constant 0 : index
    %c0_6 = arith.constant 0 : index
    %6 = vector.load %arg4[%c0_5, %c0_6] : memref<128x384xf32, #tpu.memory_space<vmem>>, vector<128x384xf32>
    tpu.vector_store %arg4[%c0_5, %c0_6], %5 {strides = array<i32>} : memref<128x384xf32, #tpu.memory_space<vmem>>, vector<128x384xf32>,
    return
  }
  func.func @transform_0(%arg0: i32) -> (i32, i32) {
    %c0_i32 = arith.constant 0 : i32
    %c0_i32_0 = arith.constant 0 : i32
    return %arg0, %c0_i32 : i32, i32
  }
  func.func @transform_1(%arg0: i32) -> (i32, i32) {
    %c0_i32 = arith.constant 0 : i32
    %c0_i32_0 = arith.constant 0 : i32
    %c0_i32_1 = arith.constant 0 : i32
    return %c0_i32, %c0_i32_0 : i32, i32
  }
  func.func @transform_2(%arg0: i32) -> (i32, i32) {
    %c0_i32 = arith.constant 0 : i32
    %c0_i32_0 = arith.constant 0 : i32
    %c0_i32_1 = arith.constant 0 : i32
    return %c0_i32, %c0_i32_0 : i32, i32
  }
  func.func @transform_3(%arg0: i32) -> (i32, i32) {
    %c0_i32 = arith.constant 0 : i32
    %c0_i32_0 = arith.constant 0 : i32
    return %arg0, %c0_i32 : i32, i32
  }
}

</mosaic_0001>

<llo_original>
// kernel: tpu_custom_call.1
$region0: #{tpu_custom_call.1}
  #allocation0 [shape = 'u32[]', space=smem, size = 0x4, offset = 0x4, fixed_abs, tag = 'smem constant byte address 0x4 - core index']
  #allocation1 [shape = 'u32[144,128]{1,0:T(1,128)}', space=vmem, size = 0x12000, scoped, tag = 'internal scratch']
  %s0 = inlined_call_operand.hbm [shape: f32[128,128], index: 0, kind: input, shape index: {}]
  %s1 = inlined_call_operand.hbm [shape: f32[128,384], index: 1, kind: input, shape index: {}]
  %s2 = inlined_call_operand.vmem [shape: f32[1,384], index: 2, kind: input, shape index: {}]
  %s3 = inlined_call_operand.hbm [shape: f32[128,384], index: 3, kind: output, shape index: {}]
  %s4 = sld [smem:[#allocation0]]
  $region30: #{tpu_custom_call.1} parent=0
    _
  %s6 = ssub.s32 1, %s4
  %s7 = scalar_select 0, %s6, %s4
  $region1: #{tpu_custom_call.1} parent=0
    #allocation2 [shape = 'u8[65536]{0}', space=vmem, size = 0x10000, scoped, tag = 'input window, operand 0, single buffered']
    #allocation3 [shape = 's32[1]{0}', space=sflag, size = 0x4, scoped, tag = 'scoped memory for tpu_custom_call.1']
    #allocation4 [shape = 's32[1]{0}', space=sflag, size = 0x4, scoped, tag = 'scoped memory for tpu_custom_call.1']
    #allocation5 [shape = 'u8[196608]{0}', space=vmem, size = 0x30000, scoped, tag = 'input window, operand 1, single buffered']
    #allocation6 [shape = 's32[1]{0}', space=sflag, size = 0x4, scoped, tag = 'scoped memory for tpu_custom_call.1']
    #allocation7 [shape = 'u8[196608]{0}', space=vmem, size = 0x30000, scoped, tag = 'output window, operand 0, single buffered']
    %8 = vsyncpa [#allocation3], 0
    %9 = vsyncpa [#allocation6], 0
    %10 = vsyncpa [#allocation4], 0
    // Predicated region
    $region2: #{tpu_custom_call.1} parent=1 // pred_check
      _
    $region3: #{tpu_custom_call.1} parent=1 // pred_check_branch
      %12 = sbr.rel (0) target = $region5
    $region4: #{tpu_custom_call.1} parent=1 // pred_region
      %s14 = ssub.s32 2048, 2048
      %15 = vsyncadd [#allocation3], %s14
      %s16 = sshll.u32 [#allocation2], 4
      %s17 = int_to_ptr.vmem [resolvable:$true] %s16
      %22 = dma.hbm_to_vmem [thread:$0]  %s0, 2048, %s17, [#allocation3], 128, 128, 8
    $region5: #{tpu_custom_call.1} parent=1 // pred_fallthru
      _
    // Predicated region
    $region6: #{tpu_custom_call.1} parent=1 // pred_check
      _
    $region7: #{tpu_custom_call.1} parent=1 // pred_check_branch
      %24 = sbr.rel (0) target = $region9
    $region8: #{tpu_custom_call.1} parent=1 // pred_region
      %s26 = ssub.s32 6144, 6144
      %27 = vsyncadd [#allocation6], %s26
      %s28 = sshll.u32 [#allocation5], 4
      %s29 = int_to_ptr.vmem [resolvable:$true] %s28
      %34 = dma.hbm_to_vmem [thread:$0]  %s1, 6144, %s29, [#allocation6], 384, 384, 24
    $region9: #{tpu_custom_call.1} parent=1 // pred_fallthru
      _
    // Predicated region
    $region10: #{tpu_custom_call.1} parent=1 // pred_check
      _
    $region11: #{tpu_custom_call.1} parent=1 // pred_check_branch
      %36 = sbr.rel (0) target = $region13
    $region12: #{tpu_custom_call.1} parent=1 // pred_region
      _
    $region13: #{tpu_custom_call.1} parent=1 // pred_fallthru
      _
    // Predicated region
    $region14: #{tpu_custom_call.1} parent=1 // pred_check
      _
    $region15: #{tpu_custom_call.1} parent=1 // pred_check_branch
      %38 = sbr.rel (0) target = $region17
    $region16: #{tpu_custom_call.1} parent=1 // pred_region
      %39 = dma.done [#allocation3], 2048
    $region17: #{tpu_custom_call.1} parent=1 // pred_fallthru
      _
    // Predicated region
    $region18: #{tpu_custom_call.1} parent=1 // pred_check
      _
    $region19: #{tpu_custom_call.1} parent=1 // pred_check_branch
      %41 = sbr.rel (0) target = $region21
    $region20: #{tpu_custom_call.1} parent=1 // pred_region
      %42 = dma.done [#allocation6], 6144
    $region21: #{tpu_custom_call.1} parent=1 // pred_fallthru
      _
    %v43 = vld [vmem:[#allocation2] sm:$0xff]
    %v44 = vld [vmem:[#allocation2 + $0x8] sm:$0xff]
    %v45 = vld [vmem:[#allocation2 + $0x10] sm:$0xff]
    %v46 = vld [vmem:[#allocation2 + $0x18] sm:$0xff]
    %v47 = vld [vmem:[#allocation2 + $0x20] sm:$0xff]
    %v48 = vld [vmem:[#allocation2 + $0x28] sm:$0xff]
    %v49 = vld [vmem:[#allocation2 + $0x30] sm:$0xff]
    %v50 = vld [vmem:[#allocation2 + $0x38] sm:$0xff]
    %v51 = vld [vmem:[#allocation2 + $0x40] sm:$0xff]
    %v52 = vld [vmem:[#allocation2 + $0x48] sm:$0xff]
    %v53 = vld [vmem:[#allocation2 + $0x50] sm:$0xff]
    %v54 = vld [vmem:[#allocation2 + $0x58] sm:$0xff]
    %v55 = vld [vmem:[#allocation2 + $0x60] sm:$0xff]
    %v56 = vld [vmem:[#allocation2 + $0x68] sm:$0xff]
    %v57 = vld [vmem:[#allocation2 + $0x70] sm:$0xff]
    %v58 = vld [vmem:[#allocation2 + $0x78] sm:$0xff]
    %v59 = vld [vmem:[#allocation5] sm:$0xff]
    %v60 = vld [vmem:[#allocation5 + $0x8] sm:$0xff]
    %v61 = vld [vmem:[#allocation5 + $0x10] sm:$0xff]
    %v62 = vld [vmem:[#allocation5 + $0x18] sm:$0xff]
    %v63 = vld [vmem:[#allocation5 + $0x20] sm:$0xff]
    %v64 = vld [vmem:[#allocation5 + $0x28] sm:$0xff]
    %v65 = vld [vmem:[#allocation5 + $0x30] sm:$0xff]
    %v66 = vld [vmem:[#allocation5 + $0x38] sm:$0xff]
    %v67 = vld [vmem:[#allocation5 + $0x40] sm:$0xff]
    %v68 = vld [vmem:[#allocation5 + $0x48] sm:$0xff]
    %v69 = vld [vmem:[#allocation5 + $0x50] sm:$0xff]
    %v70 = vld [vmem:[#allocation5 + $0x58] sm:$0xff]
    %v71 = vld [vmem:[#allocation5 + $0x60] sm:$0xff]
    %v72 = vld [vmem:[#allocation5 + $0x68] sm:$0xff]
    %v73 = vld [vmem:[#allocation5 + $0x70] sm:$0xff]
    %v74 = vld [vmem:[#allocation5 + $0x78] sm:$0xff]
    %v75 = vld [vmem:[#allocation5 + $0x80] sm:$0xff]
    %v76 = vld [vmem:[#allocation5 + $0x88] sm:$0xff]
    %v77 = vld [vmem:[#allocation5 + $0x90] sm:$0xff]
    %v78 = vld [vmem:[#allocation5 + $0x98] sm:$0xff]
    %v79 = vld [vmem:[#allocation5 + $0xa0] sm:$0xff]
    %v80 = vld [vmem:[#allocation5 + $0xa8] sm:$0xff]
    %v81 = vld [vmem:[#allocation5 + $0xb0] sm:$0xff]
    %v82 = vld [vmem:[#allocation5 + $0xb8] sm:$0xff]
    %v83 = vld [vmem:[#allocation5 + $0xc0] sm:$0xff]
    %v84 = vld [vmem:[#allocation5 + $0xc8] sm:$0xff]
    %v85 = vld [vmem:[#allocation5 + $0xd0] sm:$0xff]
    %v86 = vld [vmem:[#allocation5 + $0xd8] sm:$0xff]
    %v87 = vld [vmem:[#allocation5 + $0xe0] sm:$0xff]
    %v88 = vld [vmem:[#allocation5 + $0xe8] sm:$0xff]
    %v89 = vld [vmem:[#allocation5 + $0xf0] sm:$0xff]
    %v90 = vld [vmem:[#allocation5 + $0xf8] sm:$0xff]
    %v91 = vld [vmem:[#allocation5 + $0x100] sm:$0xff]
    %v92 = vld [vmem:[#allocation5 + $0x108] sm:$0xff]
    %v93 = vld [vmem:[#allocation5 + $0x110] sm:$0xff]
    %v94 = vld [vmem:[#allocation5 + $0x118] sm:$0xff]
    %v95 = vld [vmem:[#allocation5 + $0x120] sm:$0xff]
    %v96 = vld [vmem:[#allocation5 + $0x128] sm:$0xff]
    %v97 = vld [vmem:[#allocation5 + $0x130] sm:$0xff]
    %v98 = vld [vmem:[#allocation5 + $0x138] sm:$0xff]
    %v99 = vld [vmem:[#allocation5 + $0x140] sm:$0xff]
    %v100 = vld [vmem:[#allocation5 + $0x148] sm:$0xff]
    %v101 = vld [vmem:[#allocation5 + $0x150] sm:$0xff]
    %v102 = vld [vmem:[#allocation5 + $0x158] sm:$0xff]
    %v103 = vld [vmem:[#allocation5 + $0x160] sm:$0xff]
    %v104 = vld [vmem:[#allocation5 + $0x168] sm:$0xff]
    %v105 = vld [vmem:[#allocation5 + $0x170] sm:$0xff]
    %v106 = vld [vmem:[#allocation5 + $0x178] sm:$0xff]
    %v107 = vld [vmem:[%s2] sm:$0x7]
    %v109 = vlaneseq
    %v110 = vshrl.u32 %v109, 7
    %v111 = vsub.s32 0, %v110
    %v112 = vrot.slane %v107, %v111
    %v113 = vlaneseq
    %v114 = vshrl.u32 %v113, 7
    %v115 = vsub.s32 1, %v114
    %v116 = vrot.slane %v107, %v115
    %v117 = vlaneseq
    %v118 = vshrl.u32 %v117, 7
    %v119 = vsub.s32 2, %v118
    %v120 = vrot.slane %v107, %v119
    %124 = vmatprep.subr.mxu0 %v60
    %125 = vmatpush1.msra.mxu0 %v59
    %126 = vmatprep.subr.mxu0 %v63
    %127 = vmatpush1.msra.mxu0 %v62
    %128 = vmatprep.subr.mxu0 %v66
    %129 = vmatpush1.msra.mxu0 %v65
    %130 = vmatprep.subr.mxu0 %v69
    %131 = vmatpush1.msra.mxu0 %v68
    %132 = vmatprep.subr.mxu0 %v72
    %133 = vmatpush1.msra.mxu0 %v71
    %134 = vmatprep.subr.mxu0 %v75
    %135 = vmatpush1.msra.mxu0 %v74
    %136 = vmatprep.subr.mxu0 %v78
    %137 = vmatpush1.msra.mxu0 %v77
    %138 = vmatprep.subr.mxu0 %v81
    %139 = vmatpush1.msra.mxu0 %v80
    %140 = vmatprep.subr.mxu0 %v84
    %141 = vmatpush1.msra.mxu0 %v83
    %142 = vmatprep.subr.mxu0 %v87
    %143 = vmatpush1.msra.mxu0 %v86
    %144 = vmatprep.subr.mxu0 %v90
    %145 = vmatpush1.msra.mxu0 %v89
    %146 = vmatprep.subr.mxu0 %v93
    %147 = vmatpush1.msra.mxu0 %v92
    %148 = vmatprep.subr.mxu0 %v96
    %149 = vmatpush1.msra.mxu0 %v95
    %150 = vmatprep.subr.mxu0 %v99
    %151 = vmatpush1.msra.mxu0 %v98
    %152 = vmatprep.subr.mxu0 %v102
    %153 = vmatpush1.msra.mxu0 %v101
    %154 = vmatprep.subr.mxu0 %v105
    %155 = vmatpush1.msra.mxu0 %v104
    %156 = vmatprep.subr.mxu0 0.0
    %157 = vmatpush1.msra.mxu0 0.0
    %158 = vmatprep.subr.mxu0 0.0
    %159 = vmatpush1.msra.mxu0 0.0
    %160 = vmatprep.subr.mxu0 0.0
    %161 = vmatpush1.msra.mxu0 0.0
    %162 = vmatprep.subr.mxu0 0.0
    %163 = vmatpush1.msra.mxu0 0.0
    %164 = vmatprep.subr.mxu0 0.0
    %165 = vmatpush1.msra.mxu0 0.0
    %166 = vmatprep.subr.mxu0 0.0
    %167 = vmatpush1.msra.mxu0 0.0
    %168 = vmatprep.subr.mxu0 0.0
    %169 = vmatpush1.msra.mxu0 0.0
    %170 = vmatprep.subr.mxu0 0.0
    %171 = vmatpush1.msra.mxu0 0.0
    %172 = vmatprep.subr.mxu0 0.0
    %173 = vmatpush1.msra.mxu0 0.0
    %174 = vmatprep.subr.mxu0 0.0
    %175 = vmatpush1.msra.mxu0 0.0
    %176 = vmatprep.subr.mxu0 0.0
    %177 = vmatpush1.msra.mxu0 0.0
    %178 = vmatprep.subr.mxu0 0.0
    %179 = vmatpush1.msra.mxu0 0.0
    %180 = vmatprep.subr.mxu0 0.0
    %181 = vmatpush1.msra.mxu0 0.0
    %182 = vmatprep.subr.mxu0 0.0
    %183 = vmatpush1.msra.mxu0 0.0
    %184 = vmatprep.subr.mxu0 0.0
    %185 = vmatpush1.msra.mxu0 0.0
    %186 = vmatprep.subr.mxu0 0.0
    %187 = vmatpush1.msra.mxu0 0.0
    %188 = vmatprep.mubr.f32.mxu0 0.0
    %189 = vmatmul.mubr.f32.gmra.mrb[0].mxu0 %v43
    %v190 = vpop.f32.mrb[0].mxu0
    %v191 = vadd.f32 %v112, %v190
    %v192 = vpop.f32.mrb[0].mxu0
    %v193 = vadd.f32 %v116, %v192
    %194 = vmatprep.mubr.f32.mxu0 0.0
    %195 = vmatmul.mubr.f32.gmra.mrb[0].mxu0 %v44
    %v196 = vpop.f32.mrb[0].mxu0
    %v197 = vadd.f32 %v112, %v196
    %v198 = vpop.f32.mrb[0].mxu0
    %v199 = vadd.f32 %v116, %v198
    %200 = vmatprep.mubr.f32.mxu0 0.0
    %201 = vmatmul.mubr.f32.gmra.mrb[0].mxu0 %v45
    %v202 = vpop.f32.mrb[0].mxu0
    %v203 = vadd.f32 %v112, %v202
    %v204 = vpop.f32.mrb[0].mxu0
    %v205 = vadd.f32 %v116, %v204
    %206 = vmatprep.mubr.f32.mxu0 0.0
    %207 = vmatmul.mubr.f32.gmra.mrb[0].mxu0 %v46
    %v208 = vpop.f32.mrb[0].mxu0
    %v209 = vadd.f32 %v112, %v208
    %v210 = vpop.f32.mrb[0].mxu0
    %v211 = vadd.f32 %v116, %v210
    %212 = vmatprep.mubr.f32.mxu0 0.0
    %213 = vmatmul.mubr.f32.gmra.mrb[0].mxu0 %v47
    %v214 = vpop.f32.mrb[0].mxu0
    %v215 = vadd.f32 %v112, %v214
    %v216 = vpop.f32.mrb[0].mxu0
    %v217 = vadd.f32 %v116, %v216
    %218 = vmatprep.mubr.f32.mxu0 0.0
    %219 = vmatmul.mubr.f32.gmra.mrb[0].mxu0 %v48
    %v220 = vpop.f32.mrb[0].mxu0
    %v221 = vadd.f32 %v112, %v220
    %v222 = vpop.f32.mrb[0].mxu0
    %v223 = vadd.f32 %v116, %v222
    %224 = vmatprep.mubr.f32.mxu0 0.0
    %225 = vmatmul.mubr.f32.gmra.mrb[0].mxu0 %v49
    %v226 = vpop.f32.mrb[0].mxu0
    %v227 = vadd.f32 %v112, %v226
    %v228 = vpop.f32.mrb[0].mxu0
    %v229 = vadd.f32 %v116, %v228
    %230 = vmatprep.mubr.f32.mxu0 0.0
    %231 = vmatmul.mubr.f32.gmra.mrb[0].mxu0 %v50
    %v232 = vpop.f32.mrb[0].mxu0
    %v233 = vadd.f32 %v112, %v232
    %v234 = vpop.f32.mrb[0].mxu0
    %v235 = vadd.f32 %v116, %v234
    %236 = vmatprep.mubr.f32.mxu0 0.0
    %237 = vmatmul.mubr.f32.gmra.mrb[0].mxu0 %v51
    %v238 = vpop.f32.mrb[0].mxu0
    %v239 = vadd.f32 %v112, %v238
    %v240 = vpop.f32.mrb[0].mxu0
    %v241 = vadd.f32 %v116, %v240
    %242 = vmatprep.mubr.f32.mxu0 0.0
    %243 = vmatmul.mubr.f32.gmra.mrb[0].mxu0 %v52
    %v244 = vpop.f32.mrb[0].mxu0
    %v245 = vadd.f32 %v112, %v244
    %v246 = vpop.f32.mrb[0].mxu0
    %v247 = vadd.f32 %v116, %v246
    %248 = vmatprep.mubr.f32.mxu0 0.0
    %249 = vmatmul.mubr.f32.gmra.mrb[0].mxu0 %v53
    %v250 = vpop.f32.mrb[0].mxu0
    %v251 = vadd.f32 %v112, %v250
    %v252 = vpop.f32.mrb[0].mxu0
    %v253 = vadd.f32 %v116, %v252
    %254 = vmatprep.mubr.f32.mxu0 0.0
    %255 = vmatmul.mubr.f32.gmra.mrb[0].mxu0 %v54
    %v256 = vpop.f32.mrb[0].mxu0
    %v257 = vadd.f32 %v112, %v256
    %v258 = vpop.f32.mrb[0].mxu0
    %v259 = vadd.f32 %v116, %v258
    %260 = vmatprep.mubr.f32.mxu0 0.0
    %261 = vmatmul.mubr.f32.gmra.mrb[0].mxu0 %v55
    %v262 = vpop.f32.mrb[0].mxu0
    %v263 = vadd.f32 %v112, %v262
    %v264 = vpop.f32.mrb[0].mxu0
    %v265 = vadd.f32 %v116, %v264
    %266 = vmatprep.mubr.f32.mxu0 0.0
    %267 = vmatmul.mubr.f32.gmra.mrb[0].mxu0 %v56
    %v268 = vpop.f32.mrb[0].mxu0
    %v269 = vadd.f32 %v112, %v268
    %v270 = vpop.f32.mrb[0].mxu0
    %v271 = vadd.f32 %v116, %v270
    %272 = vmatprep.mubr.f32.mxu0 0.0
    %273 = vmatmul.mubr.f32.gmra.mrb[0].mxu0 %v57
    %v274 = vpop.f32.mrb[0].mxu0
    %v275 = vadd.f32 %v112, %v274
    %v276 = vpop.f32.mrb[0].mxu0
    %v277 = vadd.f32 %v116, %v276
    %278 = vmatprep.mubr.f32.mxu0 0.0
    %279 = vmatmul.mubr.f32.gmra.mrb[0].mxu0 %v58
    %v280 = vpop.f32.mrb[0].mxu0
    %v281 = vadd.f32 %v112, %v280
    %v282 = vpop.f32.mrb[0].mxu0
    %v283 = vadd.f32 %v116, %v282
    %284 = vdwg.mxu0
    %285 = vmatprep.subr.mxu0 0.0
    %286 = vmatpush1.msra.mxu0 %v61
    %287 = vmatprep.subr.mxu0 0.0
    %288 = vmatpush1.msra.mxu0 %v64
    %289 = vmatprep.subr.mxu0 0.0
    %290 = vmatpush1.msra.mxu0 %v67
    %291 = vmatprep.subr.mxu0 0.0
    %292 = vmatpush1.msra.mxu0 %v70
    %293 = vmatprep.subr.mxu0 0.0
    %294 = vmatpush1.msra.mxu0 %v73
    %295 = vmatprep.subr.mxu0 0.0
    %296 = vmatpush1.msra.mxu0 %v76
    %297 = vmatprep.subr.mxu0 0.0
    %298 = vmatpush1.msra.mxu0 %v79
    %299 = vmatprep.subr.mxu0 0.0
    %300 = vmatpush1.msra.mxu0 %v82
    %301 = vmatprep.subr.mxu0 0.0
    %302 = vmatpush1.msra.mxu0 %v85
    %303 = vmatprep.subr.mxu0 0.0
    %304 = vmatpush1.msra.mxu0 %v88
    %305 = vmatprep.subr.mxu0 0.0
    %306 = vmatpush1.msra.mxu0 %v91
    %307 = vmatprep.subr.mxu0 0.0
    %308 = vmatpush1.msra.mxu0 %v94
    %309 = vmatprep.subr.mxu0 0.0
    %310 = vmatpush1.msra.mxu0 %v97
    %311 = vmatprep.subr.mxu0 0.0
    %312 = vmatpush1.msra.mxu0 %v100
    %313 = vmatprep.subr.mxu0 0.0
    %314 = vmatpush1.msra.mxu0 %v103
    %315 = vmatprep.subr.mxu0 0.0
    %316 = vmatpush1.msra.mxu0 %v106
    %317 = vmatprep.subr.mxu0 0.0
    %318 = vmatpush1.msra.mxu0 0.0
    %319 = vmatprep.subr.mxu0 0.0
    %320 = vmatpush1.msra.mxu0 0.0
    %321 = vmatprep.subr.mxu0 0.0
    %322 = vmatpush1.msra.mxu0 0.0
    %323 = vmatprep.subr.mxu0 0.0
    %324 = vmatpush1.msra.mxu0 0.0
    %325 = vmatprep.subr.mxu0 0.0
    %326 = vmatpush1.msra.mxu0 0.0
    %327 = vmatprep.subr.mxu0 0.0
    %328 = vmatpush1.msra.mxu0 0.0
    %329 = vmatprep.subr.mxu0 0.0
    %330 = vmatpush1.msra.mxu0 0.0
    %331 = vmatprep.subr.mxu0 0.0
    %332 = vmatpush1.msra.mxu0 0.0
    %333 = vmatprep.subr.mxu0 0.0
    %334 = vmatpush1.msra.mxu0 0.0
    %335 = vmatprep.subr.mxu0 0.0
    %336 = vmatpush1.msra.mxu0 0.0
    %337 = vmatprep.subr.mxu0 0.0
    %338 = vmatpush1.msra.mxu0 0.0
    %339 = vmatprep.subr.mxu0 0.0
    %340 = vmatpush1.msra.mxu0 0.0
    %341 = vmatprep.subr.mxu0 0.0
    %342 = vmatpush1.msra.mxu0 0.0
    %343 = vmatprep.subr.mxu0 0.0
    %344 = vmatpush1.msra.mxu0 0.0
    %345 = vmatprep.subr.mxu0 0.0
    %346 = vmatpush1.msra.mxu0 0.0
    %347 = vmatprep.subr.mxu0 0.0
    %348 = vmatpush1.msra.mxu0 0.0
    %349 = vmatprep.mubr.f32.mxu0 0.0
    %350 = vmatmul.mubr.f32.gmra.mrb[0].mxu0 %v43
    %v351 = vpop.f32.mrb[0].mxu0
    %v352 = vadd.f32 %v120, %v351
    %v353 = vpop.f32.mrb[0].mxu0
    %354 = vmatprep.mubr.f32.mxu0 0.0
    %355 = vmatmul.mubr.f32.gmra.mrb[0].mxu0 %v44
    %v356 = vpop.f32.mrb[0].mxu0
    %v357 = vadd.f32 %v120, %v356
    %v358 = vpop.f32.mrb[0].mxu0
    %359 = vmatprep.mubr.f32.mxu0 0.0
    %360 = vmatmul.mubr.f32.gmra.mrb[0].mxu0 %v45
    %v361 = vpop.f32.mrb[0].mxu0
    %v362 = vadd.f32 %v120, %v361
    %v363 = vpop.f32.mrb[0].mxu0
    %364 = vmatprep.mubr.f32.mxu0 0.0
    %365 = vmatmul.mubr.f32.gmra.mrb[0].mxu0 %v46
    %v366 = vpop.f32.mrb[0].mxu0
    %v367 = vadd.f32 %v120, %v366
    %v368 = vpop.f32.mrb[0].mxu0
    %369 = vmatprep.mubr.f32.mxu0 0.0
    %370 = vmatmul.mubr.f32.gmra.mrb[0].mxu0 %v47
    %v371 = vpop.f32.mrb[0].mxu0
    %v372 = vadd.f32 %v120, %v371
    %v373 = vpop.f32.mrb[0].mxu0
    %374 = vmatprep.mubr.f32.mxu0 0.0
    %375 = vmatmul.mubr.f32.gmra.mrb[0].mxu0 %v48
    %v376 = vpop.f32.mrb[0].mxu0
    %v377 = vadd.f32 %v120, %v376
    %v378 = vpop.f32.mrb[0].mxu0
    %379 = vmatprep.mubr.f32.mxu0 0.0
    %380 = vmatmul.mubr.f32.gmra.mrb[0].mxu0 %v49
    %v381 = vpop.f32.mrb[0].mxu0
    %v382 = vadd.f32 %v120, %v381
    %v383 = vpop.f32.mrb[0].mxu0
    %384 = vmatprep.mubr.f32.mxu0 0.0
    %385 = vmatmul.mubr.f32.gmra.mrb[0].mxu0 %v50
    %v386 = vpop.f32.mrb[0].mxu0
    %v387 = vadd.f32 %v120, %v386
    %v388 = vpop.f32.mrb[0].mxu0
    %389 = vmatprep.mubr.f32.mxu0 0.0
    %390 = vmatmul.mubr.f32.gmra.mrb[0].mxu0 %v51
    %v391 = vpop.f32.mrb[0].mxu0
    %v392 = vadd.f32 %v120, %v391
    %v393 = vpop.f32.mrb[0].mxu0
    %394 = vmatprep.mubr.f32.mxu0 0.0
    %395 = vmatmul.mubr.f32.gmra.mrb[0].mxu0 %v52
    %v396 = vpop.f32.mrb[0].mxu0
    %v397 = vadd.f32 %v120, %v396
    %v398 = vpop.f32.mrb[0].mxu0
    %399 = vmatprep.mubr.f32.mxu0 0.0
    %400 = vmatmul.mubr.f32.gmra.mrb[0].mxu0 %v53
    %v401 = vpop.f32.mrb[0].mxu0
    %v402 = vadd.f32 %v120, %v401
    %v403 = vpop.f32.mrb[0].mxu0
    %404 = vmatprep.mubr.f32.mxu0 0.0
    %405 = vmatmul.mubr.f32.gmra.mrb[0].mxu0 %v54
    %v406 = vpop.f32.mrb[0].mxu0
    %v407 = vadd.f32 %v120, %v406
    %v408 = vpop.f32.mrb[0].mxu0
    %409 = vmatprep.mubr.f32.mxu0 0.0
    %410 = vmatmul.mubr.f32.gmra.mrb[0].mxu0 %v55
    %v411 = vpop.f32.mrb[0].mxu0
    %v412 = vadd.f32 %v120, %v411
    %v413 = vpop.f32.mrb[0].mxu0
    %414 = vmatprep.mubr.f32.mxu0 0.0
    %415 = vmatmul.mubr.f32.gmra.mrb[0].mxu0 %v56
    %v416 = vpop.f32.mrb[0].mxu0
    %v417 = vadd.f32 %v120, %v416
    %v418 = vpop.f32.mrb[0].mxu0
    %419 = vmatprep.mubr.f32.mxu0 0.0
    %420 = vmatmul.mubr.f32.gmra.mrb[0].mxu0 %v57
    %v421 = vpop.f32.mrb[0].mxu0
    %v422 = vadd.f32 %v120, %v421
    %v423 = vpop.f32.mrb[0].mxu0
    %424 = vmatprep.mubr.f32.mxu0 0.0
    %425 = vmatmul.mubr.f32.gmra.mrb[0].mxu0 %v58
    %v426 = vpop.f32.mrb[0].mxu0
    %v427 = vadd.f32 %v120, %v426
    %v428 = vpop.f32.mrb[0].mxu0
    %429 = vdwg.mxu0
    %430 = vst [vmem:[#allocation7] sm:$0xff] %v191
    %431 = vst [vmem:[#allocation7 + $0x8] sm:$0xff] %v193
    %432 = vst [vmem:[#allocation7 + $0x10] sm:$0xff] %v352
    %433 = vst [vmem:[#allocation7 + $0x18] sm:$0xff] %v197
    %434 = vst [vmem:[#allocation7 + $0x20] sm:$0xff] %v199
    %435 = vst [vmem:[#allocation7 + $0x28] sm:$0xff] %v357
    %436 = vst [vmem:[#allocation7 + $0x30] sm:$0xff] %v203
    %437 = vst [vmem:[#allocation7 + $0x38] sm:$0xff] %v205
    %438 = vst [vmem:[#allocation7 + $0x40] sm:$0xff] %v362
    %439 = vst [vmem:[#allocation7 + $0x48] sm:$0xff] %v209
    %440 = vst [vmem:[#allocation7 + $0x50] sm:$0xff] %v211
    %441 = vst [vmem:[#allocation7 + $0x58] sm:$0xff] %v367
    %442 = vst [vmem:[#allocation7 + $0x60] sm:$0xff] %v215
    %443 = vst [vmem:[#allocation7 + $0x68] sm:$0xff] %v217
    %444 = vst [vmem:[#allocation7 + $0x70] sm:$0xff] %v372
    %445 = vst [vmem:[#allocation7 + $0x78] sm:$0xff] %v221
    %446 = vst [vmem:[#allocation7 + $0x80] sm:$0xff] %v223
    %447 = vst [vmem:[#allocation7 + $0x88] sm:$0xff] %v377
    %448 = vst [vmem:[#allocation7 + $0x90] sm:$0xff] %v227
    %449 = vst [vmem:[#allocation7 + $0x98] sm:$0xff] %v229
    %450 = vst [vmem:[#allocation7 + $0xa0] sm:$0xff] %v382
    %451 = vst [vmem:[#allocation7 + $0xa8] sm:$0xff] %v233
    %452 = vst [vmem:[#allocation7 + $0xb0] sm:$0xff] %v235
    %453 = vst [vmem:[#allocation7 + $0xb8] sm:$0xff] %v387
    %454 = vst [vmem:[#allocation7 + $0xc0] sm:$0xff] %v239
    %455 = vst [vmem:[#allocation7 + $0xc8] sm:$0xff] %v241
    %456 = vst [vmem:[#allocation7 + $0xd0] sm:$0xff] %v392
    %457 = vst [vmem:[#allocation7 + $0xd8] sm:$0xff] %v245
    %458 = vst [vmem:[#allocation7 + $0xe0] sm:$0xff] %v247
    %459 = vst [vmem:[#allocation7 + $0xe8] sm:$0xff] %v397
    %460 = vst [vmem:[#allocation7 + $0xf0] sm:$0xff] %v251
    %461 = vst [vmem:[#allocation7 + $0xf8] sm:$0xff] %v253
    %462 = vst [vmem:[#allocation7 + $0x100] sm:$0xff] %v402
    %463 = vst [vmem:[#allocation7 + $0x108] sm:$0xff] %v257
    %464 = vst [vmem:[#allocation7 + $0x110] sm:$0xff] %v259
    %465 = vst [vmem:[#allocation7 + $0x118] sm:$0xff] %v407
    %466 = vst [vmem:[#allocation7 + $0x120] sm:$0xff] %v263
    %467 = vst [vmem:[#allocation7 + $0x128] sm:$0xff] %v265
    %468 = vst [vmem:[#allocation7 + $0x130] sm:$0xff] %v412
    %469 = vst [vmem:[#allocation7 + $0x138] sm:$0xff] %v269
    %470 = vst [vmem:[#allocation7 + $0x140] sm:$0xff] %v271
    %471 = vst [vmem:[#allocation7 + $0x148] sm:$0xff] %v417
    %472 = vst [vmem:[#allocation7 + $0x150] sm:$0xff] %v275
    %473 = vst [vmem:[#allocation7 + $0x158] sm:$0xff] %v277
    %474 = vst [vmem:[#allocation7 + $0x160] sm:$0xff] %v422
    %475 = vst [vmem:[#allocation7 + $0x168] sm:$0xff] %v281
    %476 = vst [vmem:[#allocation7 + $0x170] sm:$0xff] %v283
    %477 = vst [vmem:[#allocation7 + $0x178] sm:$0xff] %v427
    // Predicated region
    $region22: #{tpu_custom_call.1} parent=1 // pred_check
      _
    $region23: #{tpu_custom_call.1} parent=1 // pred_check_branch
      %479 = sbr.rel (0) target = $region25
    $region24: #{tpu_custom_call.1} parent=1 // pred_region
      %s481 = ssub.s32 6144, 6144
      %482 = vsyncadd [#allocation4], %s481
      %s483 = sshll.u32 [#allocation7], 4
      %s484 = int_to_ptr.vmem [resolvable:$true] %s483
      %489 = dma.vmem_to_hbm [thread:$0]  %s484, 6144, %s3, [#allocation4], 384, 384, 24
    $region25: #{tpu_custom_call.1} parent=1 // pred_fallthru
      _
    // Predicated region
    $region26: #{tpu_custom_call.1} parent=1 // pred_check
      _
    $region27: #{tpu_custom_call.1} parent=1 // pred_check_branch
      %491 = sbr.rel (0) target = $region29
    $region28: #{tpu_custom_call.1} parent=1 // pred_region
      %492 = dma.done [#allocation4], 6144
    $region29: #{tpu_custom_call.1} parent=1 // pred_fallthru
      _
    %493 = vsyncpa [#allocation3], 1
    %494 = vsyncpa [#allocation6], 1
    %495 = vsyncpa [#allocation4], 1

</llo_original>
